<compile_context>
chip_gen: v6e
topology: v6e:2x2x1
jax: 0.10.0
libtpu: 0.0.40
codegen_flags: <defaults>
</compile_context>

<pallas_src>
import functools

import jax
import jax.numpy as jnp
from jax.experimental import pallas as pl
from jax.experimental.pallas import tpu as pltpu


def _round_up(x, m):
    return ((x + m - 1) // m) * m


def _mlp_actor_kernel(x_ref, w1_ref, b1_ref, w2_ref, b2_ref, w3_ref, b3_ref,
                      out_ref, *, act_limit):
    # fc1: bf16 MXU operands, f32 accumulation.
    x = x_ref[...].astype(jnp.bfloat16)
    h = jnp.dot(x, w1_ref[...], preferred_element_type=jnp.float32)
    # Hidden bias-add + ReLU in the bias dtype (bf16 on v6e/v7x, f32 if chosen).
    h = jnp.maximum(h.astype(b1_ref.dtype) + b1_ref[...], 0)
    # fc2
    h = jnp.dot(h.astype(jnp.bfloat16), w2_ref[...],
                preferred_element_type=jnp.float32)
    h = jnp.maximum(h.astype(b2_ref.dtype) + b2_ref[...], 0)
    # fc3 + tanh + act_limit scale, kept in f32.
    o = jnp.dot(h.astype(jnp.bfloat16), w3_ref[...],
                preferred_element_type=jnp.float32)
    o = jnp.tanh(o + b3_ref[...])
    out_ref[...] = (act_limit * o).astype(out_ref.dtype)


def prepare_actor_params(w1, b1, w2, b2, w3, b3, *, hidden_dtype=jnp.bfloat16):
    """One-time parameter prep (call at init, NOT per forward call).

    Weights -> bf16 (MXU-native operands), hidden-layer biases -> hidden_dtype
    (bf16 for v6e/v7x VALUs, float32 for v5e), final bias -> f32.
    """
    return (w1.astype(jnp.bfloat16), jnp.reshape(b1, (1, -1)).astype(hidden_dtype),
            w2.astype(jnp.bfloat16), jnp.reshape(b2, (1, -1)).astype(hidden_dtype),
            w3.astype(jnp.bfloat16), jnp.reshape(b3, (1, -1)).astype(jnp.float32))


def mlp_actor_forward(state, params, act_limit, *, block_b=2048):
    """MLPActor forward.

    state: (B, dimState) f32.  params: output of prepare_actor_params.
    Returns (B, dimAction) in state.dtype.
    """
    w1, b1, w2, b2, w3, b3 = params
    B, dim_state = state.shape
    hidden_dim = w1.shape[1]
    dim_action = w3.shape[1]

    # Batch tile: big enough to amortize per-step overhead, small enough that
    # the "parallel" batch axis has >= 2 steps whenever B > 8 (v7x megacore).
    tb = max(8, min(_round_up(block_b, 8), _round_up(-(-B // 2), 8)))
    grid = (-(-B // tb),)  # ragged final block handled by Pallas masking

    # VMEM budget: single-buffered resident weights + double-buffered x/out
    # tiles + a few (tb, hidden) f32 intermediates of headroom.  Cap at v7x's
    # 64 MiB physical VMEM.
    weight_bytes = sum(int(a.size) * a.dtype.itemsize for a in params)
    vmem_bytes = (weight_bytes
                  + 2 * tb * dim_state * 4
                  + 2 * tb * dim_action * 4
                  + 4 * tb * hidden_dim * 4)
    vmem_limit = int(min(max(vmem_bytes * 3 // 2, 32 << 20), 64 << 20))

    kernel = functools.partial(_mlp_actor_kernel, act_limit=float(act_limit))
    out_shape = jax.ShapeDtypeStruct((B, dim_action), state.dtype)
    compiler_params = pltpu.CompilerParams(
        dimension_semantics=("parallel",), vmem_limit_bytes=vmem_limit)

    def _run(weight_pipeline_mode):
        if weight_pipeline_mode is None:
            resident = lambda s: pl.BlockSpec(s, lambda i: (0, 0))
        else:
            resident = lambda s: pl.BlockSpec(
                s, lambda i: (0, 0), pipeline_mode=weight_pipeline_mode)
        return pl.pallas_call(
            kernel,
            out_shape=out_shape,
            grid=grid,
            in_specs=[
                pl.BlockSpec((tb, dim_state), lambda i: (i, 0)),  # streamed x
                resident((dim_state, hidden_dim)),                 # w1
                resident((1, hidden_dim)),                         # b1
                resident((hidden_dim, hidden_dim)),                # w2
                resident((1, hidden_dim)),                         # b2
                resident((hidden_dim, dim_action)),                # w3
                resident((1, dim_action)),                         # b3
            ],
            out_specs=pl.BlockSpec((tb, dim_action), lambda i: (i, 0)),
            compiler_params=compiler_params,
        )(state, w1, b1, w2, b2, w3, b3)

    if hasattr(pl, "Buffered"):
        try:
            return _run(pl.Buffered(1))  # single-buffer the resident weights
        except Exception:
            pass  # fall back to default (double-buffered) resident weights
    return _run(None)


def init_params(key, dim_state, dim_action, hidden_dim):
    """Deterministic PyTorch-Linear-style uniform init (U[-1/sqrt(fan_in), ..])."""
    keys = jax.random.split(key, 6)

    def linear(kw, kb, fan_in, fan_out):
        bound = 1.0 / jnp.sqrt(jnp.float32(fan_in))
        w = jax.random.uniform(kw, (fan_in, fan_out), jnp.float32, -bound, bound)
        b = jax.random.uniform(kb, (1, fan_out), jnp.float32, -bound, bound)
        return w, b

    w1, b1 = linear(keys[0], keys[1], dim_state, hidden_dim)
    w2, b2 = linear(keys[2], keys[3], hidden_dim, hidden_dim)
    w3, b3 = linear(keys[4], keys[5], hidden_dim, dim_action)
    return w1, b1, w2, b2, w3, b3


def _reference_kernel_math(state, params, act_limit):
    # Mirrors the kernel's bf16-operand / f32-accumulation math exactly,
    # so the tolerance check can be tight.
    w1, b1, w2, b2, w3, b3 = params
    bf = jnp.bfloat16
    h = jnp.dot(state.astype(bf), w1, preferred_element_type=jnp.float32)
    h = jnp.maximum(h.astype(b1.dtype) + b1, 0)
    h = jnp.dot(h.astype(bf), w2, preferred_element_type=jnp.float32)
    h = jnp.maximum(h.astype(b2.dtype) + b2, 0)
    o = jnp.dot(h.astype(bf), w3, preferred_element_type=jnp.float32)
    return act_limit * jnp.tanh(o + b3)


def _reference_f32(state, w1, b1, w2, b2, w3, b3, act_limit):
    # Pure-f32 math of MLPActor.forward (loose sanity check).
    h = jax.nn.relu(state @ w1 + b1)
    h = jax.nn.relu(h @ w2 + b2)
    return act_limit * jnp.tanh(h @ w3 + b3)


if __name__ == "__main__":
    # Small shapes consistent with the module's forward.
    batch = 8
    dim_state = 16
    hidden_dim = 32
    dim_action = 8
    act_limit = 2.0

    key = jax.random.PRNGKey(0)
    k_params, k_state = jax.random.split(key)
    w1, b1, w2, b2, w3, b3 = init_params(k_params, dim_state, dim_action, hidden_dim)
    state = jax.random.normal(k_state, (batch, dim_state), jnp.float32)

    # One-time weight prep (bf16 cast, bias dtypes) hoisted out of forward.
    params = prepare_actor_params(w1, b1, w2, b2, w3, b3)

    out = mlp_actor_forward(state, params, act_limit)
    out = jax.block_until_ready(out)
    assert out.shape == (batch, dim_action)

    ref_tight = _reference_kernel_math(state, params, act_limit)
    assert jnp.allclose(out, ref_tight, atol=2e-3, rtol=2e-3), (
        float(jnp.max(jnp.abs(out - ref_tight))))

    ref_f32 = _reference_f32(state, w1, b1, w2, b2, w3, b3, act_limit)
    assert jnp.allclose(out, ref_f32, atol=3e-2, rtol=3e-2), (
        float(jnp.max(jnp.abs(out - ref_f32))))

    print("KERNEL_OK")
</pallas_src>

<mosaic_0001>
module attributes {stable_mosaic.version = 11 : i64} {
  func.func @_mlp_actor_kernel(%arg0: i32, %arg1: memref<8x16xf32, #tpu.memory_space<vmem>>, %arg2: memref<16x32xbf16, #tpu.memory_space<vmem>>, %arg3: memref<1x32xbf16, #tpu.memory_space<vmem>>, %arg4: memref<32x32xbf16, #tpu.memory_space<vmem>>, %arg5: memref<1x32xbf16, #tpu.memory_space<vmem>>, %arg6: memref<32x8xbf16, #tpu.memory_space<vmem>>, %arg7: memref<1x8xf32, #tpu.memory_space<vmem>>, %arg8: memref<8x8xf32, #tpu.memory_space<vmem>>) attributes {dimension_semantics = [#tpu.dimension_semantics<parallel>], iteration_bounds = array<i64: 1>, scalar_prefetch = 0 : i64, scratch_operands = 0 : i64, tpu.core_type = #tpu.core_type<tc>, window_params = [{transform_indices = @transform_0, window_bounds = array<i64: 8, 16>}, {pipeline_mode = #tpu.pipeline_mode<synchronous>, transform_indices = @transform_1, window_bounds = array<i64: 16, 32>}, {pipeline_mode = #tpu.pipeline_mode<synchronous>, transform_indices = @transform_2, window_bounds = array<i64: 1, 32>}, {pipeline_mode = #tpu.pipeline_mode<synchronous>, transform_indices = @transform_3, window_bounds = array<i64: 32, 32>}, {pipeline_mode = #tpu.pipeline_mode<synchronous>, transform_indices = @transform_4, window_bounds = array<i64: 1, 32>}, {pipeline_mode = #tpu.pipeline_mode<synchronous>, transform_indices = @transform_5, window_bounds = array<i64: 32, 8>}, {pipeline_mode = #tpu.pipeline_mode<synchronous>, transform_indices = @transform_6, window_bounds = array<i64: 1, 8>}, {transform_indices = @transform_7, window_bounds = array<i64: 8, 8>}]} {
    %c0 = arith.constant 0 : index
    %c0_0 = arith.constant 0 : index
    %0 = vector.load %arg1[%c0, %c0_0] : memref<8x16xf32, #tpu.memory_space<vmem>>, vector<8x16xf32>
    %1 = arith.truncf %0 : vector<8x16xf32> to vector<8x16xbf16>
    %c0_1 = arith.constant 0 : index
    %c0_2 = arith.constant 0 : index
    %2 = vector.load %arg2[%c0_1, %c0_2] : memref<16x32xbf16, #tpu.memory_space<vmem>>, vector<16x32xbf16>
    %cst = arith.constant dense<0.000000e+00> : vector<8x32xf32>
    %3 = tpu.matmul %1, %2, %cst {dimension_numbers = #tpu.dot_dimension_numbers<[1], [0], [0], [1], [0, 0, 1, 1], [], []>} : vector<8x16xbf16>, vector<16x32xbf16>, vector<8x32xf32> -> vector<8x32xf32>
    %4 = arith.truncf %3 : vector<8x32xf32> to vector<8x32xbf16>
    %c0_3 = arith.constant 0 : index
    %c0_4 = arith.constant 0 : index
    %5 = vector.load %arg3[%c0_3, %c0_4] : memref<1x32xbf16, #tpu.memory_space<vmem>>, vector<1x32xbf16>
    %6 = vector.broadcast %5 : vector<1x32xbf16> to vector<8x32xbf16>
    %7 = arith.addf %4, %6 : vector<8x32xbf16>
    %cst_5 = arith.constant 0.000000e+00 : bf16
    %8 = vector.broadcast %cst_5 : bf16 to vector<8x32xbf16>
    %9 = arith.maximumf %7, %8 : vector<8x32xbf16>
    %c0_6 = arith.constant 0 : index
    %c0_7 = arith.constant 0 : index
    %10 = vector.load %arg4[%c0_6, %c0_7] : memref<32x32xbf16, #tpu.memory_space<vmem>>, vector<32x32xbf16>
    %cst_8 = arith.constant dense<0.000000e+00> : vector<8x32xf32>
    %11 = tpu.matmul %9, %10, %cst_8 {dimension_numbers = #tpu.dot_dimension_numbers<[1], [0], [0], [1], [0, 0, 1, 1], [], []>} : vector<8x32xbf16>, vector<32x32xbf16>, vector<8x32xf32> -> vector<8x32xf32>
    %12 = arith.truncf %11 : vector<8x32xf32> to vector<8x32xbf16>
    %c0_9 = arith.constant 0 : index
    %c0_10 = arith.constant 0 : index
    %13 = vector.load %arg5[%c0_9, %c0_10] : memref<1x32xbf16, #tpu.memory_space<vmem>>, vector<1x32xbf16>
    %14 = vector.broadcast %13 : vector<1x32xbf16> to vector<8x32xbf16>
    %15 = arith.addf %12, %14 : vector<8x32xbf16>
    %cst_11 = arith.constant 0.000000e+00 : bf16
    %16 = vector.broadcast %cst_11 : bf16 to vector<8x32xbf16>
    %17 = arith.maximumf %15, %16 : vector<8x32xbf16>
    %c0_12 = arith.constant 0 : index
    %c0_13 = arith.constant 0 : index
    %18 = vector.load %arg6[%c0_12, %c0_13] : memref<32x8xbf16, #tpu.memory_space<vmem>>, vector<32x8xbf16>
    %cst_14 = arith.constant dense<0.000000e+00> : vector<8x8xf32>
    %19 = tpu.matmul %17, %18, %cst_14 {dimension_numbers = #tpu.dot_dimension_numbers<[1], [0], [0], [1], [0, 0, 1, 1], [], []>} : vector<8x32xbf16>, vector<32x8xbf16>, vector<8x8xf32> -> vector<8x8xf32>
    %c0_15 = arith.constant 0 : index
    %c0_16 = arith.constant 0 : index
    %20 = vector.load %arg7[%c0_15, %c0_16] : memref<1x8xf32, #tpu.memory_space<vmem>>, vector<1x8xf32>
    %21 = vector.broadcast %20 : vector<1x8xf32> to vector<8x8xf32>
    %22 = arith.addf %19, %21 : vector<8x8xf32>
    %23 = math.tanh %22 : vector<8x8xf32>
    %cst_17 = arith.constant 2.000000e+00 : f32
    %24 = vector.broadcast %cst_17 : f32 to vector<8x8xf32>
    %25 = arith.mulf %24, %23 : vector<8x8xf32>
    %c0_18 = arith.constant 0 : index
    %c0_19 = arith.constant 0 : index
    %26 = vector.load %arg8[%c0_18, %c0_19] : memref<8x8xf32, #tpu.memory_space<vmem>>, vector<8x8xf32>
    tpu.vector_store %arg8[%c0_18, %c0_19], %25 {strides = array<i32>} : memref<8x8xf32, #tpu.memory_space<vmem>>, vector<8x8xf32>,
    return
  }
  func.func @transform_0(%arg0: i32) -> (i32, i32) {
    %c0_i32 = arith.constant 0 : i32
    %c0_i32_0 = arith.constant 0 : i32
    return %arg0, %c0_i32 : i32, i32
  }
  func.func @transform_1(%arg0: i32) -> (i32, i32) {
    %c0_i32 = arith.constant 0 : i32
    %c0_i32_0 = arith.constant 0 : i32
    %c0_i32_1 = arith.constant 0 : i32
    return %c0_i32, %c0_i32_0 : i32, i32
  }
  func.func @transform_2(%arg0: i32) -> (i32, i32) {
    %c0_i32 = arith.constant 0 : i32
    %c0_i32_0 = arith.constant 0 : i32
    %c0_i32_1 = arith.constant 0 : i32
    return %c0_i32, %c0_i32_0 : i32, i32
  }
  func.func @transform_3(%arg0: i32) -> (i32, i32) {
    %c0_i32 = arith.constant 0 : i32
    %c0_i32_0 = arith.constant 0 : i32
    %c0_i32_1 = arith.constant 0 : i32
    return %c0_i32, %c0_i32_0 : i32, i32
  }
  func.func @transform_4(%arg0: i32) -> (i32, i32) {
    %c0_i32 = arith.constant 0 : i32
    %c0_i32_0 = arith.constant 0 : i32
    %c0_i32_1 = arith.constant 0 : i32
    return %c0_i32, %c0_i32_0 : i32, i32
  }
  func.func @transform_5(%arg0: i32) -> (i32, i32) {
    %c0_i32 = arith.constant 0 : i32
    %c0_i32_0 = arith.constant 0 : i32
    %c0_i32_1 = arith.constant 0 : i32
    return %c0_i32, %c0_i32_0 : i32, i32
  }
  func.func @transform_6(%arg0: i32) -> (i32, i32) {
    %c0_i32 = arith.constant 0 : i32
    %c0_i32_0 = arith.constant 0 : i32
    %c0_i32_1 = arith.constant 0 : i32
    return %c0_i32, %c0_i32_0 : i32, i32
  }
  func.func @transform_7(%arg0: i32) -> (i32, i32) {
    %c0_i32 = arith.constant 0 : i32
    %c0_i32_0 = arith.constant 0 : i32
    return %arg0, %c0_i32 : i32, i32
  }
}

module attributes {stable_mosaic.version = 11 : i64} {
  func.func @_mlp_actor_kernel(%arg0: i32, %arg1: memref<8x16xf32, #tpu.memory_space<vmem>>, %arg2: memref<16x32xbf16, #tpu.memory_space<vmem>>, %arg3: memref<1x32xbf16, #tpu.memory_space<vmem>>, %arg4: memref<32x32xbf16, #tpu.memory_space<vmem>>, %arg5: memref<1x32xbf16, #tpu.memory_space<vmem>>, %arg6: memref<32x8xbf16, #tpu.memory_space<vmem>>, %arg7: memref<1x8xf32, #tpu.memory_space<vmem>>, %arg8: memref<8x8xf32, #tpu.memory_space<vmem>>) attributes {dimension_semantics = [#tpu.dimension_semantics<parallel>], iteration_bounds = array<i64: 1>, scalar_prefetch = 0 : i64, scratch_operands = 0 : i64, tpu.core_type = #tpu.core_type<tc>, window_params = [{transform_indices = @transform_0, window_bounds = array<i64: 8, 16>}, {pipeline_mode = #tpu.pipeline_mode<synchronous>, transform_indices = @transform_1, window_bounds = array<i64: 16, 32>}, {pipeline_mode = #tpu.pipeline_mode<synchronous>, transform_indices = @transform_2, window_bounds = array<i64: 1, 32>}, {pipeline_mode = #tpu.pipeline_mode<synchronous>, transform_indices = @transform_3, window_bounds = array<i64: 32, 32>}, {pipeline_mode = #tpu.pipeline_mode<synchronous>, transform_indices = @transform_4, window_bounds = array<i64: 1, 32>}, {pipeline_mode = #tpu.pipeline_mode<synchronous>, transform_indices = @transform_5, window_bounds = array<i64: 32, 8>}, {pipeline_mode = #tpu.pipeline_mode<synchronous>, transform_indices = @transform_6, window_bounds = array<i64: 1, 8>}, {transform_indices = @transform_7, window_bounds = array<i64: 8, 8>}]} {
    %c0 = arith.constant 0 : index
    %c0_0 = arith.constant 0 : index
    %0 = vector.load %arg1[%c0, %c0_0] : memref<8x16xf32, #tpu.memory_space<vmem>>, vector<8x16xf32>
    %1 = arith.truncf %0 : vector<8x16xf32> to vector<8x16xbf16>
    %c0_1 = arith.constant 0 : index
    %c0_2 = arith.constant 0 : index
    %2 = vector.load %arg2[%c0_1, %c0_2] : memref<16x32xbf16, #tpu.memory_space<vmem>>, vector<16x32xbf16>
    %cst = arith.constant dense<0.000000e+00> : vector<8x32xf32>
    %3 = tpu.matmul %1, %2, %cst {dimension_numbers = #tpu.dot_dimension_numbers<[1], [0], [0], [1], [0, 0, 1, 1], [], []>} : vector<8x16xbf16>, vector<16x32xbf16>, vector<8x32xf32> -> vector<8x32xf32>
    %4 = arith.truncf %3 : vector<8x32xf32> to vector<8x32xbf16>
    %c0_3 = arith.constant 0 : index
    %c0_4 = arith.constant 0 : index
    %5 = vector.load %arg3[%c0_3, %c0_4] : memref<1x32xbf16, #tpu.memory_space<vmem>>, vector<1x32xbf16>
    %6 = vector.broadcast %5 : vector<1x32xbf16> to vector<8x32xbf16>
    %7 = arith.addf %4, %6 : vector<8x32xbf16>
    %cst_5 = arith.constant 0.000000e+00 : bf16
    %8 = vector.broadcast %cst_5 : bf16 to vector<8x32xbf16>
    %9 = arith.maximumf %7, %8 : vector<8x32xbf16>
    %c0_6 = arith.constant 0 : index
    %c0_7 = arith.constant 0 : index
    %10 = vector.load %arg4[%c0_6, %c0_7] : memref<32x32xbf16, #tpu.memory_space<vmem>>, vector<32x32xbf16>
    %cst_8 = arith.constant dense<0.000000e+00> : vector<8x32xf32>
    %11 = tpu.matmul %9, %10, %cst_8 {dimension_numbers = #tpu.dot_dimension_numbers<[1], [0], [0], [1], [0, 0, 1, 1], [], []>} : vector<8x32xbf16>, vector<32x32xbf16>, vector<8x32xf32> -> vector<8x32xf32>
    %12 = arith.truncf %11 : vector<8x32xf32> to vector<8x32xbf16>
    %c0_9 = arith.constant 0 : index
    %c0_10 = arith.constant 0 : index
    %13 = vector.load %arg5[%c0_9, %c0_10] : memref<1x32xbf16, #tpu.memory_space<vmem>>, vector<1x32xbf16>
    %14 = vector.broadcast %13 : vector<1x32xbf16> to vector<8x32xbf16>
    %15 = arith.addf %12, %14 : vector<8x32xbf16>
    %cst_11 = arith.constant 0.000000e+00 : bf16
    %16 = vector.broadcast %cst_11 : bf16 to vector<8x32xbf16>
    %17 = arith.maximumf %15, %16 : vector<8x32xbf16>
    %c0_12 = arith.constant 0 : index
    %c0_13 = arith.constant 0 : index
    %18 = vector.load %arg6[%c0_12, %c0_13] : memref<32x8xbf16, #tpu.memory_space<vmem>>, vector<32x8xbf16>
    %cst_14 = arith.constant dense<0.000000e+00> : vector<8x8xf32>
    %19 = tpu.matmul %17, %18, %cst_14 {dimension_numbers = #tpu.dot_dimension_numbers<[1], [0], [0], [1], [0, 0, 1, 1], [], []>} : vector<8x32xbf16>, vector<32x8xbf16>, vector<8x8xf32> -> vector<8x8xf32>
    %c0_15 = arith.constant 0 : index
    %c0_16 = arith.constant 0 : index
    %20 = vector.load %arg7[%c0_15, %c0_16] : memref<1x8xf32, #tpu.memory_space<vmem>>, vector<1x8xf32>
    %21 = vector.broadcast %20 : vector<1x8xf32> to vector<8x8xf32>
    %22 = arith.addf %19, %21 : vector<8x8xf32>
    %23 = math.tanh %22 : vector<8x8xf32>
    %cst_17 = arith.constant 2.000000e+00 : f32
    %24 = vector.broadcast %cst_17 : f32 to vector<8x8xf32>
    %25 = arith.mulf %24, %23 : vector<8x8xf32>
    %c0_18 = arith.constant 0 : index
    %c0_19 = arith.constant 0 : index
    %26 = vector.load %arg8[%c0_18, %c0_19] : memref<8x8xf32, #tpu.memory_space<vmem>>, vector<8x8xf32>
    tpu.vector_store %arg8[%c0_18, %c0_19], %25 {strides = array<i32>} : memref<8x8xf32, #tpu.memory_space<vmem>>, vector<8x8xf32>,
    return
  }
  func.func @transform_0(%arg0: i32) -> (i32, i32) {
    %c0_i32 = arith.constant 0 : i32
    %c0_i32_0 = arith.constant 0 : i32
    return %arg0, %c0_i32 : i32, i32
  }
  func.func @transform_1(%arg0: i32) -> (i32, i32) {
    %c0_i32 = arith.constant 0 : i32
    %c0_i32_0 = arith.constant 0 : i32
    %c0_i32_1 = arith.constant 0 : i32
    return %c0_i32, %c0_i32_0 : i32, i32
  }
  func.func @transform_2(%arg0: i32) -> (i32, i32) {
    %c0_i32 = arith.constant 0 : i32
    %c0_i32_0 = arith.constant 0 : i32
    %c0_i32_1 = arith.constant 0 : i32
    return %c0_i32, %c0_i32_0 : i32, i32
  }
  func.func @transform_3(%arg0: i32) -> (i32, i32) {
    %c0_i32 = arith.constant 0 : i32
    %c0_i32_0 = arith.constant 0 : i32
    %c0_i32_1 = arith.constant 0 : i32
    return %c0_i32, %c0_i32_0 : i32, i32
  }
  func.func @transform_4(%arg0: i32) -> (i32, i32) {
    %c0_i32 = arith.constant 0 : i32
    %c0_i32_0 = arith.constant 0 : i32
    %c0_i32_1 = arith.constant 0 : i32
    return %c0_i32, %c0_i32_0 : i32, i32
  }
  func.func @transform_5(%arg0: i32) -> (i32, i32) {
    %c0_i32 = arith.constant 0 : i32
    %c0_i32_0 = arith.constant 0 : i32
    %c0_i32_1 = arith.constant 0 : i32
    return %c0_i32, %c0_i32_0 : i32, i32
  }
  func.func @transform_6(%arg0: i32) -> (i32, i32) {
    %c0_i32 = arith.constant 0 : i32
    %c0_i32_0 = arith.constant 0 : i32
    %c0_i32_1 = arith.constant 0 : i32
    return %c0_i32, %c0_i32_0 : i32, i32
  }
  func.func @transform_7(%arg0: i32) -> (i32, i32) {
    %c0_i32 = arith.constant 0 : i32
    %c0_i32_0 = arith.constant 0 : i32
    return %arg0, %c0_i32 : i32, i32
  }
}

</mosaic_0001>

<llo_original>
// kernel: tpu_custom_call.1
$region0: #{tpu_custom_call.1}
  #allocation0 [shape = 'u32[]', space=smem, size = 0x4, offset = 0x4, fixed_abs, tag = 'smem constant byte address 0x4 - core index']
  #allocation1 [shape = 'u32[144,128]{1,0:T(1,128)}', space=vmem, size = 0x12000, scoped, tag = 'internal scratch']
  %s0 = inlined_call_operand.vmem [shape: f32[8,16], index: 0, kind: input, shape index: {}]
  %s1 = inlined_call_operand.hbm [shape: bf16[16,32], index: 1, kind: input, shape index: {}]
  %s2 = inlined_call_operand.vmem [shape: bf16[1,32], index: 2, kind: input, shape index: {}]
  %s3 = inlined_call_operand.vmem [shape: bf16[32,32], index: 3, kind: input, shape index: {}]
  %s4 = inlined_call_operand.hbm [shape: bf16[1,32], index: 4, kind: input, shape index: {}]
  %s5 = inlined_call_operand.vmem [shape: bf16[32,8], index: 5, kind: input, shape index: {}]
  %s6 = inlined_call_operand.vmem [shape: f32[1,8], index: 6, kind: input, shape index: {}]
  %s7 = inlined_call_operand.hbm [shape: f32[8,8], index: 7, kind: output, shape index: {}]
  %s8 = sld [smem:[#allocation0]]
  $region46: #{tpu_custom_call.1} parent=0
    _
  %s10 = ssub.s32 1, %s8
  %s11 = scalar_select 0, %s10, %s8
  $region1: #{tpu_custom_call.1} parent=0
    #allocation2 [shape = 'u8[4096]{0}', space=vmem, size = 0x1000, scoped, tag = 'input window, operand 1, single buffered']
    #allocation3 [shape = 's32[1]{0}', space=sflag, size = 0x4, scoped, tag = 'scoped memory for tpu_custom_call.1']
    #allocation4 [shape = 's32[1]{0}', space=sflag, size = 0x4, scoped, tag = 'scoped memory for tpu_custom_call.1']
    #allocation5 [shape = 'u8[512]{0}', space=vmem, size = 0x400, scoped, tag = 'input window, operand 4, single buffered']
    #allocation6 [shape = 's32[1]{0}', space=sflag, size = 0x4, scoped, tag = 'scoped memory for tpu_custom_call.1']
    #allocation7 [shape = 'u8[4096]{0}', space=vmem, size = 0x1000, scoped, tag = 'output window, operand 0, single buffered']
    %12 = vsyncpa [#allocation3], 0
    %13 = vsyncpa [#allocation6], 0
    %14 = vsyncpa [#allocation4], 0
    // Predicated region
    $region2: #{tpu_custom_call.1} parent=1 // pred_check
      _
    $region3: #{tpu_custom_call.1} parent=1 // pred_check_branch
      %16 = sbr.rel (0) target = $region5
    $region4: #{tpu_custom_call.1} parent=1 // pred_region
      _
    $region5: #{tpu_custom_call.1} parent=1 // pred_fallthru
      _
    // Predicated region
    $region6: #{tpu_custom_call.1} parent=1 // pred_check
      _
    $region7: #{tpu_custom_call.1} parent=1 // pred_check_branch
      %18 = sbr.rel (0) target = $region9
    $region8: #{tpu_custom_call.1} parent=1 // pred_region
      %s20 = ssub.s32 128, 128
      %21 = vsyncadd [#allocation3], %s20
      %s22 = sshll.u32 [#allocation2], 4
      %s23 = int_to_ptr.vmem [resolvable:$true] %s22
      %28 = dma.hbm_to_vmem [thread:$0]  %s1, 128, %s23, [#allocation3], 64, 64, 4
    $region9: #{tpu_custom_call.1} parent=1 // pred_fallthru
      _
    // Predicated region
    $region10: #{tpu_custom_call.1} parent=1 // pred_check
      _
    $region11: #{tpu_custom_call.1} parent=1 // pred_check_branch
      %30 = sbr.rel (0) target = $region13
    $region12: #{tpu_custom_call.1} parent=1 // pred_region
      _
    $region13: #{tpu_custom_call.1} parent=1 // pred_fallthru
      _
    // Predicated region
    $region14: #{tpu_custom_call.1} parent=1 // pred_check
      _
    $region15: #{tpu_custom_call.1} parent=1 // pred_check_branch
      %32 = sbr.rel (0) target = $region17
    $region16: #{tpu_custom_call.1} parent=1 // pred_region
      _
    $region17: #{tpu_custom_call.1} parent=1 // pred_fallthru
      _
    // Predicated region
    $region18: #{tpu_custom_call.1} parent=1 // pred_check
      _
    $region19: #{tpu_custom_call.1} parent=1 // pred_check_branch
      %34 = sbr.rel (0) target = $region21
    $region20: #{tpu_custom_call.1} parent=1 // pred_region
      %s36 = ssub.s32 16, 16
      %37 = vsyncadd [#allocation6], %s36
      %s39 = sshll.u32 [#allocation5], 4
      %s40 = int_to_ptr.vmem [resolvable:$true] %s39
      %42 = dma.hbm_to_vmem [thread:$0]  %s4, 16, %s40, [#allocation6]
    $region21: #{tpu_custom_call.1} parent=1 // pred_fallthru
      _
    // Predicated region
    $region22: #{tpu_custom_call.1} parent=1 // pred_check
      _
    $region23: #{tpu_custom_call.1} parent=1 // pred_check_branch
      %44 = sbr.rel (0) target = $region25
    $region24: #{tpu_custom_call.1} parent=1 // pred_region
      _
    $region25: #{tpu_custom_call.1} parent=1 // pred_fallthru
      _
    // Predicated region
    $region26: #{tpu_custom_call.1} parent=1 // pred_check
      _
    $region27: #{tpu_custom_call.1} parent=1 // pred_check_branch
      %46 = sbr.rel (0) target = $region29
    $region28: #{tpu_custom_call.1} parent=1 // pred_region
      _
    $region29: #{tpu_custom_call.1} parent=1 // pred_fallthru
      _
    // Predicated region
    $region30: #{tpu_custom_call.1} parent=1 // pred_check
      _
    $region31: #{tpu_custom_call.1} parent=1 // pred_check_branch
      %48 = sbr.rel (0) target = $region33
    $region32: #{tpu_custom_call.1} parent=1 // pred_region
      %49 = dma.done [#allocation3], 128
    $region33: #{tpu_custom_call.1} parent=1 // pred_fallthru
      _
    // Predicated region
    $region34: #{tpu_custom_call.1} parent=1 // pred_check
      _
    $region35: #{tpu_custom_call.1} parent=1 // pred_check_branch
      %51 = sbr.rel (0) target = $region37
    $region36: #{tpu_custom_call.1} parent=1 // pred_region
      %52 = dma.done [#allocation6], 16
    $region37: #{tpu_custom_call.1} parent=1 // pred_fallthru
      _
    %v54 = vld [vmem:[%s0] sm:$0xff]
    %v55 = vpack.c.bf16 %v54, %v54
    %v56 = vld [vmem:[#allocation2] sm:$0xf]
    %v57 = vld [vmem:[#allocation2 + $0x4] sm:$0xf]
    %v60 = vunpack.c.l.b16 %v56
    %v61 = vunpack.c.l.b16 %v57
    %v62 = vpack.c.b16 %v61, %v60
    %vm64 = vcmask 130048
    %v66 = vsel %vm64, %v55, 0
    %68 = vmatprep.subr.bf16.mxu0 0
    %69 = vmatpush1.bf16.msra.mxu0 0
    %70 = vmatprep.subr.bf16.mxu0 0
    %71 = vmatpush1.bf16.msra.mxu0 0
    %72 = vmatprep.subr.bf16.mxu0 0
    %73 = vmatpush1.bf16.msra.mxu0 0
    %74 = vmatprep.subr.bf16.mxu0 0
    %75 = vmatpush1.bf16.msra.mxu0 0
    %76 = vmatprep.subr.bf16.mxu0 0
    %77 = vmatpush1.bf16.msra.mxu0 0
    %78 = vmatprep.subr.bf16.mxu0 0
    %79 = vmatpush1.bf16.msra.mxu0 0
    %80 = vmatprep.subr.bf16.mxu0 0
    %81 = vmatpush1.bf16.msra.mxu0 0
    %82 = vmatprep.subr.bf16.mxu0 0
    %83 = vmatpush1.bf16.msra.mxu0 %v62
    %84 = vmatprep.subr.bf16.mxu0 0
    %85 = vmatpush2.bf16.msra.mxu0 0
    %86 = vmatprep.subr.bf16.mxu0 0
    %87 = vmatpush2.bf16.msra.mxu0 0
    %88 = vmatprep.subr.bf16.mxu0 0
    %89 = vmatpush2.bf16.msra.mxu0 0
    %90 = vmatprep.subr.bf16.mxu0 0
    %91 = vmatpush2.bf16.msra.mxu0 0
    %92 = vmatprep.subr.bf16.mxu0 0
    %93 = vmatpush2.bf16.msra.mxu0 0
    %94 = vmatprep.subr.bf16.mxu0 0
    %95 = vmatpush2.bf16.msra.mxu0 0
    %96 = vmatprep.subr.bf16.mxu0 0
    %97 = vmatpush2.bf16.msra.mxu0 0
    %98 = vmatprep.subr.bf16.mxu0 0
    %99 = vmatpush2.bf16.msra.mxu0 0
    %100 = vmatprep.mubr.bf16.mxu0 0
    %101 = vmatmul.mubr.bf16.gmra.mxu0 %v66
    %v102 = vpop.f32.mrf.mxu0
    %v103 = vadd.f32 0.0, %v102
    %v104 = vpop.f32.mrf.mxu0
    %v105 = vpop.f32.mrf.mxu0
    %v106 = vpop.f32.mrf.mxu0
    %107 = vdwg.mxu0
    %v108 = vpack.c.bf16 %v103, %v103
    %v109 = vld [vmem:[%s2] sm:$0x1]
    %v111 = vpack.i.b16 %v109, %v109
    %v113 = vlaneseq
    %v114 = vshrl.u32 %v113, 7
    %v115 = vsub.s32 0, %v114
    %v116 = vrot.slane %v111, %v115
    %v117 = vadd.bf16 %v108, %v116
    %v118 = vmax.bf16 %v117, 0
    %v119 = vld [vmem:[%s3] sm:$0xf]
    %v120 = vld [vmem:[%s3 + $0x4] sm:$0xf]
    %v121 = vld [vmem:[%s3 + $0x8] sm:$0xf]
    %v122 = vld [vmem:[%s3 + $0xc] sm:$0xf]
    %v127 = vunpack.c.l.b16 %v119
    %v128 = vunpack.c.l.b16 %v120
    %v129 = vunpack.c.l.b16 %v121
    %v130 = vunpack.c.l.b16 %v122
    %v131 = vpack.c.b16 %v128, %v127
    %v132 = vpack.c.b16 %v130, %v129
    %vm135 = vcmask 261120
    %v137 = vsel %vm135, %v118, 0
    %139 = vmatprep.subr.bf16.mxu0 0
    %140 = vmatpush1.bf16.msra.mxu0 0
    %141 = vmatprep.subr.bf16.mxu0 0
    %142 = vmatpush1.bf16.msra.mxu0 0
    %143 = vmatprep.subr.bf16.mxu0 0
    %144 = vmatpush1.bf16.msra.mxu0 0
    %145 = vmatprep.subr.bf16.mxu0 0
    %146 = vmatpush1.bf16.msra.mxu0 0
    %147 = vmatprep.subr.bf16.mxu0 0
    %148 = vmatpush1.bf16.msra.mxu0 0
    %149 = vmatprep.subr.bf16.mxu0 0
    %150 = vmatpush1.bf16.msra.mxu0 0
    %151 = vmatprep.subr.bf16.mxu0 0
    %152 = vmatpush1.bf16.msra.mxu0 %v132
    %153 = vmatprep.subr.bf16.mxu0 0
    %154 = vmatpush1.bf16.msra.mxu0 %v131
    %155 = vmatprep.subr.bf16.mxu0 0
    %156 = vmatpush2.bf16.msra.mxu0 0
    %157 = vmatprep.subr.bf16.mxu0 0
    %158 = vmatpush2.bf16.msra.mxu0 0
    %159 = vmatprep.subr.bf16.mxu0 0
    %160 = vmatpush2.bf16.msra.mxu0 0
    %161 = vmatprep.subr.bf16.mxu0 0
    %162 = vmatpush2.bf16.msra.mxu0 0
    %163 = vmatprep.subr.bf16.mxu0 0
    %164 = vmatpush2.bf16.msra.mxu0 0
    %165 = vmatprep.subr.bf16.mxu0 0
    %166 = vmatpush2.bf16.msra.mxu0 0
    %167 = vmatprep.subr.bf16.mxu0 0
    %168 = vmatpush2.bf16.msra.mxu0 0
    %169 = vmatprep.subr.bf16.mxu0 0
    %170 = vmatpush2.bf16.msra.mxu0 0
    %171 = vmatprep.mubr.bf16.mxu0 0
    %172 = vmatmul.mubr.bf16.gmra.mxu0 %v137
    %v173 = vpop.f32.mrf.mxu0
    %v174 = vadd.f32 0.0, %v173
    %v175 = vpop.f32.mrf.mxu0
    %v176 = vpop.f32.mrf.mxu0
    %v177 = vpop.f32.mrf.mxu0
    %178 = vdwg.mxu0
    %v179 = vpack.c.bf16 %v174, %v174
    %v180 = vld [vmem:[#allocation5] sm:$0x1]
    %v182 = vpack.i.b16 %v180, %v180
    %v184 = vlaneseq
    %v185 = vshrl.u32 %v184, 7
    %v186 = vsub.s32 0, %v185
    %v187 = vrot.slane %v182, %v186
    %v188 = vadd.bf16 %v179, %v187
    %v189 = vmax.bf16 %v188, 0
    %v190 = vld [vmem:[%s5] sm:$0xf]
    %v191 = vld [vmem:[%s5 + $0x4] sm:$0xf]
    %v192 = vld [vmem:[%s5 + $0x8] sm:$0xf]
    %v193 = vld [vmem:[%s5 + $0xc] sm:$0xf]
    %v194 = vld [vmem:[%s6] sm:$0x1]
    %v196 = vlaneseq
    %v197 = vshrl.u32 %v196, 7
    %v198 = vsub.s32 0, %v197
    %v199 = vrot.slane %v194, %v198
    %v205 = vunpack.c.l.b16 %v190
    %v206 = vunpack.c.l.b16 %v191
    %v207 = vunpack.c.l.b16 %v192
    %v208 = vunpack.c.l.b16 %v193
    %v209 = vpack.c.b16 %v206, %v205
    %v210 = vpack.c.b16 %v208, %v207
    %v214 = vsel %vm135, %v189, 0
    %216 = vmatprep.subr.bf16.mxu0 0
    %217 = vmatpush1.bf16.msra.mxu0 0
    %218 = vmatprep.subr.bf16.mxu0 0
    %219 = vmatpush1.bf16.msra.mxu0 0
    %220 = vmatprep.subr.bf16.mxu0 0
    %221 = vmatpush1.bf16.msra.mxu0 0
    %222 = vmatprep.subr.bf16.mxu0 0
    %223 = vmatpush1.bf16.msra.mxu0 0
    %224 = vmatprep.subr.bf16.mxu0 0
    %225 = vmatpush1.bf16.msra.mxu0 0
    %226 = vmatprep.subr.bf16.mxu0 0
    %227 = vmatpush1.bf16.msra.mxu0 0
    %228 = vmatprep.subr.bf16.mxu0 0
    %229 = vmatpush1.bf16.msra.mxu0 %v210
    %230 = vmatprep.subr.bf16.mxu0 0
    %231 = vmatpush1.bf16.msra.mxu0 %v209
    %232 = vmatprep.subr.bf16.mxu0 0
    %233 = vmatpush2.bf16.msra.mxu0 0
    %234 = vmatprep.subr.bf16.mxu0 0
    %235 = vmatpush2.bf16.msra.mxu0 0
    %236 = vmatprep.subr.bf16.mxu0 0
    %237 = vmatpush2.bf16.msra.mxu0 0
    %238 = vmatprep.subr.bf16.mxu0 0
    %239 = vmatpush2.bf16.msra.mxu0 0
    %240 = vmatprep.subr.bf16.mxu0 0
    %241 = vmatpush2.bf16.msra.mxu0 0
    %242 = vmatprep.subr.bf16.mxu0 0
    %243 = vmatpush2.bf16.msra.mxu0 0
    %244 = vmatprep.subr.bf16.mxu0 0
    %245 = vmatpush2.bf16.msra.mxu0 0
    %246 = vmatprep.subr.bf16.mxu0 0
    %247 = vmatpush2.bf16.msra.mxu0 0
    %248 = vmatprep.mubr.bf16.mxu0 0
    %249 = vmatmul.mubr.bf16.gmra.mxu0 %v214
    %v250 = vpop.f32.mrf.mxu0
    %v251 = vadd.f32 %v199, %v250
    %v252 = vpop.f32.mrf.mxu0
    %v253 = vpop.f32.mrf.mxu0
    %v254 = vpop.f32.mrf.mxu0
    %255 = vdwg.mxu0
    %v256 = vtanh.pop %v251
    %v257 = vmul.f32 %v256, 2.0
    %vm258 = vcmask 64512
    %259 = vst.msk [vmem:[#allocation7] sm:$0xff] %vm258, %v257
    // Predicated region
    $region38: #{tpu_custom_call.1} parent=1 // pred_check
      _
    $region39: #{tpu_custom_call.1} parent=1 // pred_check_branch
      %261 = sbr.rel (0) target = $region41
    $region40: #{tpu_custom_call.1} parent=1 // pred_region
      %s263 = ssub.s32 128, 128
      %264 = vsyncadd [#allocation4], %s263
      %s266 = sshll.u32 [#allocation7], 4
      %s267 = int_to_ptr.vmem [resolvable:$true] %s266
      %269 = dma.vmem_to_hbm [thread:$0]  %s267, 128, %s7, [#allocation4]
    $region41: #{tpu_custom_call.1} parent=1 // pred_fallthru
      _
    // Predicated region
    $region42: #{tpu_custom_call.1} parent=1 // pred_check
      _
    $region43: #{tpu_custom_call.1} parent=1 // pred_check_branch
      %271 = sbr.rel (0) target = $region45
    $region44: #{tpu_custom_call.1} parent=1 // pred_region
      %272 = dma.done [#allocation4], 128
    $region45: #{tpu_custom_call.1} parent=1 // pred_fallthru
      _
    %273 = vsyncpa [#allocation3], 1
    %274 = vsyncpa [#allocation6], 1
    %275 = vsyncpa [#allocation4], 1

// kernel: tpu_custom_call.1
$region0: #{tpu_custom_call.1}
  #allocation0 [shape = 'u32[]', space=smem, size = 0x4, offset = 0x4, fixed_abs, tag = 'smem constant byte address 0x4 - core index']
  #allocation1 [shape = 'u32[144,128]{1,0:T(1,128)}', space=vmem, size = 0x12000, scoped, tag = 'internal scratch']
  %s0 = inlined_call_operand.vmem [shape: f32[8,16], index: 0, kind: input, shape index: {}]
  %s1 = inlined_call_operand.hbm [shape: bf16[16,32], index: 1, kind: input, shape index: {}]
  %s2 = inlined_call_operand.vmem [shape: bf16[1,32], index: 2, kind: input, shape index: {}]
  %s3 = inlined_call_operand.vmem [shape: bf16[32,32], index: 3, kind: input, shape index: {}]
  %s4 = inlined_call_operand.hbm [shape: bf16[1,32], index: 4, kind: input, shape index: {}]
  %s5 = inlined_call_operand.vmem [shape: bf16[32,8], index: 5, kind: input, shape index: {}]
  %s6 = inlined_call_operand.vmem [shape: f32[1,8], index: 6, kind: input, shape index: {}]
  %s7 = inlined_call_operand.hbm [shape: f32[8,8], index: 7, kind: output, shape index: {}]
  %s8 = sld [smem:[#allocation0]]
  $region46: #{tpu_custom_call.1} parent=0
    _
  %s10 = ssub.s32 1, %s8
  %s11 = scalar_select 0, %s10, %s8
  $region1: #{tpu_custom_call.1} parent=0
    #allocation2 [shape = 'u8[4096]{0}', space=vmem, size = 0x1000, scoped, tag = 'input window, operand 1, single buffered']
    #allocation3 [shape = 's32[1]{0}', space=sflag, size = 0x4, scoped, tag = 'scoped memory for tpu_custom_call.1']
    #allocation4 [shape = 's32[1]{0}', space=sflag, size = 0x4, scoped, tag = 'scoped memory for tpu_custom_call.1']
    #allocation5 [shape = 'u8[512]{0}', space=vmem, size = 0x400, scoped, tag = 'input window, operand 4, single buffered']
    #allocation6 [shape = 's32[1]{0}', space=sflag, size = 0x4, scoped, tag = 'scoped memory for tpu_custom_call.1']
    #allocation7 [shape = 'u8[4096]{0}', space=vmem, size = 0x1000, scoped, tag = 'output window, operand 0, single buffered']
    %12 = vsyncpa [#allocation3], 0
    %13 = vsyncpa [#allocation6], 0
    %14 = vsyncpa [#allocation4], 0
    // Predicated region
    $region2: #{tpu_custom_call.1} parent=1 // pred_check
      _
    $region3: #{tpu_custom_call.1} parent=1 // pred_check_branch
      %16 = sbr.rel (0) target = $region5
    $region4: #{tpu_custom_call.1} parent=1 // pred_region
      _
    $region5: #{tpu_custom_call.1} parent=1 // pred_fallthru
      _
    // Predicated region
    $region6: #{tpu_custom_call.1} parent=1 // pred_check
      _
    $region7: #{tpu_custom_call.1} parent=1 // pred_check_branch
      %18 = sbr.rel (0) target = $region9
    $region8: #{tpu_custom_call.1} parent=1 // pred_region
      %s20 = ssub.s32 128, 128
      %21 = vsyncadd [#allocation3], %s20
      %s22 = sshll.u32 [#allocation2], 4
      %s23 = int_to_ptr.vmem [resolvable:$true] %s22
      %28 = dma.hbm_to_vmem [thread:$0]  %s1, 128, %s23, [#allocation3], 64, 64, 4
    $region9: #{tpu_custom_call.1} parent=1 // pred_fallthru
      _
    // Predicated region
    $region10: #{tpu_custom_call.1} parent=1 // pred_check
      _
    $region11: #{tpu_custom_call.1} parent=1 // pred_check_branch
      %30 = sbr.rel (0) target = $region13
    $region12: #{tpu_custom_call.1} parent=1 // pred_region
      _
    $region13: #{tpu_custom_call.1} parent=1 // pred_fallthru
      _
    // Predicated region
    $region14: #{tpu_custom_call.1} parent=1 // pred_check
      _
    $region15: #{tpu_custom_call.1} parent=1 // pred_check_branch
      %32 = sbr.rel (0) target = $region17
    $region16: #{tpu_custom_call.1} parent=1 // pred_region
      _
    $region17: #{tpu_custom_call.1} parent=1 // pred_fallthru
      _
    // Predicated region
    $region18: #{tpu_custom_call.1} parent=1 // pred_check
      _
    $region19: #{tpu_custom_call.1} parent=1 // pred_check_branch
      %34 = sbr.rel (0) target = $region21
    $region20: #{tpu_custom_call.1} parent=1 // pred_region
      %s36 = ssub.s32 16, 16
      %37 = vsyncadd [#allocation6], %s36
      %s39 = sshll.u32 [#allocation5], 4
      %s40 = int_to_ptr.vmem [resolvable:$true] %s39
      %42 = dma.hbm_to_vmem [thread:$0]  %s4, 16, %s40, [#allocation6]
    $region21: #{tpu_custom_call.1} parent=1 // pred_fallthru
      _
    // Predicated region
    $region22: #{tpu_custom_call.1} parent=1 // pred_check
      _
    $region23: #{tpu_custom_call.1} parent=1 // pred_check_branch
      %44 = sbr.rel (0) target = $region25
    $region24: #{tpu_custom_call.1} parent=1 // pred_region
      _
    $region25: #{tpu_custom_call.1} parent=1 // pred_fallthru
      _
    // Predicated region
    $region26: #{tpu_custom_call.1} parent=1 // pred_check
      _
    $region27: #{tpu_custom_call.1} parent=1 // pred_check_branch
      %46 = sbr.rel (0) target = $region29
    $region28: #{tpu_custom_call.1} parent=1 // pred_region
      _
    $region29: #{tpu_custom_call.1} parent=1 // pred_fallthru
      _
    // Predicated region
    $region30: #{tpu_custom_call.1} parent=1 // pred_check
      _
    $region31: #{tpu_custom_call.1} parent=1 // pred_check_branch
      %48 = sbr.rel (0) target = $region33
    $region32: #{tpu_custom_call.1} parent=1 // pred_region
      %49 = dma.done [#allocation3], 128
    $region33: #{tpu_custom_call.1} parent=1 // pred_fallthru
      _
    // Predicated region
    $region34: #{tpu_custom_call.1} parent=1 // pred_check
      _
    $region35: #{tpu_custom_call.1} parent=1 // pred_check_branch
      %51 = sbr.rel (0) target = $region37
    $region36: #{tpu_custom_call.1} parent=1 // pred_region
      %52 = dma.done [#allocation6], 16
    $region37: #{tpu_custom_call.1} parent=1 // pred_fallthru
      _
    %v54 = vld [vmem:[%s0] sm:$0xff]
    %v55 = vpack.c.bf16 %v54, %v54
    %v56 = vld [vmem:[#allocation2] sm:$0xf]
    %v57 = vld [vmem:[#allocation2 + $0x4] sm:$0xf]
    %v60 = vunpack.c.l.b16 %v56
    %v61 = vunpack.c.l.b16 %v57
    %v62 = vpack.c.b16 %v61, %v60
    %vm64 = vcmask 130048
    %v66 = vsel %vm64, %v55, 0
    %68 = vmatprep.subr.bf16.mxu0 0
    %69 = vmatpush1.bf16.msra.mxu0 0
    %70 = vmatprep.subr.bf16.mxu0 0
    %71 = vmatpush1.bf16.msra.mxu0 0
    %72 = vmatprep.subr.bf16.mxu0 0
    %73 = vmatpush1.bf16.msra.mxu0 0
    %74 = vmatprep.subr.bf16.mxu0 0
    %75 = vmatpush1.bf16.msra.mxu0 0
    %76 = vmatprep.subr.bf16.mxu0 0
    %77 = vmatpush1.bf16.msra.mxu0 0
    %78 = vmatprep.subr.bf16.mxu0 0
    %79 = vmatpush1.bf16.msra.mxu0 0
    %80 = vmatprep.subr.bf16.mxu0 0
    %81 = vmatpush1.bf16.msra.mxu0 0
    %82 = vmatprep.subr.bf16.mxu0 0
    %83 = vmatpush1.bf16.msra.mxu0 %v62
    %84 = vmatprep.subr.bf16.mxu0 0
    %85 = vmatpush2.bf16.msra.mxu0 0
    %86 = vmatprep.subr.bf16.mxu0 0
    %87 = vmatpush2.bf16.msra.mxu0 0
    %88 = vmatprep.subr.bf16.mxu0 0
    %89 = vmatpush2.bf16.msra.mxu0 0
    %90 = vmatprep.subr.bf16.mxu0 0
    %91 = vmatpush2.bf16.msra.mxu0 0
    %92 = vmatprep.subr.bf16.mxu0 0
    %93 = vmatpush2.bf16.msra.mxu0 0
    %94 = vmatprep.subr.bf16.mxu0 0
    %95 = vmatpush2.bf16.msra.mxu0 0
    %96 = vmatprep.subr.bf16.mxu0 0
    %97 = vmatpush2.bf16.msra.mxu0 0
    %98 = vmatprep.subr.bf16.mxu0 0
    %99 = vmatpush2.bf16.msra.mxu0 0
    %100 = vmatprep.mubr.bf16.mxu0 0
    %101 = vmatmul.mubr.bf16.gmra.mxu0 %v66
    %v102 = vpop.f32.mrf.mxu0
    %v103 = vadd.f32 0.0, %v102
    %v104 = vpop.f32.mrf.mxu0
    %v105 = vpop.f32.mrf.mxu0
    %v106 = vpop.f32.mrf.mxu0
    %107 = vdwg.mxu0
    %v108 = vpack.c.bf16 %v103, %v103
    %v109 = vld [vmem:[%s2] sm:$0x1]
    %v111 = vpack.i.b16 %v109, %v109
    %v113 = vlaneseq
    %v114 = vshrl.u32 %v113, 7
    %v115 = vsub.s32 0, %v114
    %v116 = vrot.slane %v111, %v115
    %v117 = vadd.bf16 %v108, %v116
    %v118 = vmax.bf16 %v117, 0
    %v119 = vld [vmem:[%s3] sm:$0xf]
    %v120 = vld [vmem:[%s3 + $0x4] sm:$0xf]
    %v121 = vld [vmem:[%s3 + $0x8] sm:$0xf]
    %v122 = vld [vmem:[%s3 + $0xc] sm:$0xf]
    %v127 = vunpack.c.l.b16 %v119
    %v128 = vunpack.c.l.b16 %v120
    %v129 = vunpack.c.l.b16 %v121
    %v130 = vunpack.c.l.b16 %v122
    %v131 = vpack.c.b16 %v128, %v127
    %v132 = vpack.c.b16 %v130, %v129
    %vm135 = vcmask 261120
    %v137 = vsel %vm135, %v118, 0
    %139 = vmatprep.subr.bf16.mxu0 0
    %140 = vmatpush1.bf16.msra.mxu0 0
    %141 = vmatprep.subr.bf16.mxu0 0
    %142 = vmatpush1.bf16.msra.mxu0 0
    %143 = vmatprep.subr.bf16.mxu0 0
    %144 = vmatpush1.bf16.msra.mxu0 0
    %145 = vmatprep.subr.bf16.mxu0 0
    %146 = vmatpush1.bf16.msra.mxu0 0
    %147 = vmatprep.subr.bf16.mxu0 0
    %148 = vmatpush1.bf16.msra.mxu0 0
    %149 = vmatprep.subr.bf16.mxu0 0
    %150 = vmatpush1.bf16.msra.mxu0 0
    %151 = vmatprep.subr.bf16.mxu0 0
    %152 = vmatpush1.bf16.msra.mxu0 %v132
    %153 = vmatprep.subr.bf16.mxu0 0
    %154 = vmatpush1.bf16.msra.mxu0 %v131
    %155 = vmatprep.subr.bf16.mxu0 0
    %156 = vmatpush2.bf16.msra.mxu0 0
    %157 = vmatprep.subr.bf16.mxu0 0
    %158 = vmatpush2.bf16.msra.mxu0 0
    %159 = vmatprep.subr.bf16.mxu0 0
    %160 = vmatpush2.bf16.msra.mxu0 0
    %161 = vmatprep.subr.bf16.mxu0 0
    %162 = vmatpush2.bf16.msra.mxu0 0
    %163 = vmatprep.subr.bf16.mxu0 0
    %164 = vmatpush2.bf16.msra.mxu0 0
    %165 = vmatprep.subr.bf16.mxu0 0
    %166 = vmatpush2.bf16.msra.mxu0 0
    %167 = vmatprep.subr.bf16.mxu0 0
    %168 = vmatpush2.bf16.msra.mxu0 0
    %169 = vmatprep.subr.bf16.mxu0 0
    %170 = vmatpush2.bf16.msra.mxu0 0
    %171 = vmatprep.mubr.bf16.mxu0 0
    %172 = vmatmul.mubr.bf16.gmra.mxu0 %v137
    %v173 = vpop.f32.mrf.mxu0
    %v174 = vadd.f32 0.0, %v173
    %v175 = vpop.f32.mrf.mxu0
    %v176 = vpop.f32.mrf.mxu0
    %v177 = vpop.f32.mrf.mxu0
    %178 = vdwg.mxu0
    %v179 = vpack.c.bf16 %v174, %v174
    %v180 = vld [vmem:[#allocation5] sm:$0x1]
    %v182 = vpack.i.b16 %v180, %v180
    %v184 = vlaneseq
    %v185 = vshrl.u32 %v184, 7
    %v186 = vsub.s32 0, %v185
    %v187 = vrot.slane %v182, %v186
    %v188 = vadd.bf16 %v179, %v187
    %v189 = vmax.bf16 %v188, 0
    %v190 = vld [vmem:[%s5] sm:$0xf]
    %v191 = vld [vmem:[%s5 + $0x4] sm:$0xf]
    %v192 = vld [vmem:[%s5 + $0x8] sm:$0xf]
    %v193 = vld [vmem:[%s5 + $0xc] sm:$0xf]
    %v194 = vld [vmem:[%s6] sm:$0x1]
    %v196 = vlaneseq
    %v197 = vshrl.u32 %v196, 7
    %v198 = vsub.s32 0, %v197
    %v199 = vrot.slane %v194, %v198
    %v205 = vunpack.c.l.b16 %v190
    %v206 = vunpack.c.l.b16 %v191
    %v207 = vunpack.c.l.b16 %v192
    %v208 = vunpack.c.l.b16 %v193
    %v209 = vpack.c.b16 %v206, %v205
    %v210 = vpack.c.b16 %v208, %v207
    %v214 = vsel %vm135, %v189, 0
    %216 = vmatprep.subr.bf16.mxu0 0
    %217 = vmatpush1.bf16.msra.mxu0 0
    %218 = vmatprep.subr.bf16.mxu0 0
    %219 = vmatpush1.bf16.msra.mxu0 0
    %220 = vmatprep.subr.bf16.mxu0 0
    %221 = vmatpush1.bf16.msra.mxu0 0
    %222 = vmatprep.subr.bf16.mxu0 0
    %223 = vmatpush1.bf16.msra.mxu0 0
    %224 = vmatprep.subr.bf16.mxu0 0
    %225 = vmatpush1.bf16.msra.mxu0 0
    %226 = vmatprep.subr.bf16.mxu0 0
    %227 = vmatpush1.bf16.msra.mxu0 0
    %228 = vmatprep.subr.bf16.mxu0 0
    %229 = vmatpush1.bf16.msra.mxu0 %v210
    %230 = vmatprep.subr.bf16.mxu0 0
    %231 = vmatpush1.bf16.msra.mxu0 %v209
    %232 = vmatprep.subr.bf16.mxu0 0
    %233 = vmatpush2.bf16.msra.mxu0 0
    %234 = vmatprep.subr.bf16.mxu0 0
    %235 = vmatpush2.bf16.msra.mxu0 0
    %236 = vmatprep.subr.bf16.mxu0 0
    %237 = vmatpush2.bf16.msra.mxu0 0
    %238 = vmatprep.subr.bf16.mxu0 0
    %239 = vmatpush2.bf16.msra.mxu0 0
    %240 = vmatprep.subr.bf16.mxu0 0
    %241 = vmatpush2.bf16.msra.mxu0 0
    %242 = vmatprep.subr.bf16.mxu0 0
    %243 = vmatpush2.bf16.msra.mxu0 0
    %244 = vmatprep.subr.bf16.mxu0 0
    %245 = vmatpush2.bf16.msra.mxu0 0
    %246 = vmatprep.subr.bf16.mxu0 0
    %247 = vmatpush2.bf16.msra.mxu0 0
    %248 = vmatprep.mubr.bf16.mxu0 0
    %249 = vmatmul.mubr.bf16.gmra.mxu0 %v214
    %v250 = vpop.f32.mrf.mxu0
    %v251 = vadd.f32 %v199, %v250
    %v252 = vpop.f32.mrf.mxu0
    %v253 = vpop.f32.mrf.mxu0
    %v254 = vpop.f32.mrf.mxu0
    %255 = vdwg.mxu0
    %v256 = vtanh.pop %v251
    %v257 = vmul.f32 %v256, 2.0
    %vm258 = vcmask 64512
    %259 = vst.msk [vmem:[#allocation7] sm:$0xff] %vm258, %v257
    // Predicated region
    $region38: #{tpu_custom_call.1} parent=1 // pred_check
      _
    $region39: #{tpu_custom_call.1} parent=1 // pred_check_branch
      %261 = sbr.rel (0) target = $region41
    $region40: #{tpu_custom_call.1} parent=1 // pred_region
      %s263 = ssub.s32 128, 128
      %264 = vsyncadd [#allocation4], %s263
      %s266 = sshll.u32 [#allocation7], 4
      %s267 = int_to_ptr.vmem [resolvable:$true] %s266
      %269 = dma.vmem_to_hbm [thread:$0]  %s267, 128, %s7, [#allocation4]
    $region41: #{tpu_custom_call.1} parent=1 // pred_fallthru
      _
    // Predicated region
    $region42: #{tpu_custom_call.1} parent=1 // pred_check
      _
    $region43: #{tpu_custom_call.1} parent=1 // pred_check_branch
      %271 = sbr.rel (0) target = $region45
    $region44: #{tpu_custom_call.1} parent=1 // pred_region
      %272 = dma.done [#allocation4], 128
    $region45: #{tpu_custom_call.1} parent=1 // pred_fallthru
      _
    %273 = vsyncpa [#allocation3], 1
    %274 = vsyncpa [#allocation6], 1
    %275 = vsyncpa [#allocation4], 1

</llo_original>
